<compile_context>
chip_gen: v6e
topology: v6e:2x2x1
jax: 0.10.0
libtpu: 0.0.40
codegen_flags: <defaults>
</compile_context>

<pallas_src>
import jax
import jax.numpy as jnp
from jax.experimental import pallas as pl
from jax.experimental.pallas import tpu as pltpu


def _mediator_mlp_kernel(hu_ref, w1_ref, c1_ref, w2_ref, b2_ref,
                         w3_ref, b3_ref, out_ref):
    """Fused 3-layer MLP on one (tb, E) batch tile; weights resident in VMEM."""
    cdt = w2_ref.dtype          # MXU input dtype (f32 or bf16); accumulate f32
    # Layer 1: hu @ W1_hu^T + (folded const contribution + b1), ReLU
    h = jnp.dot(hu_ref[...], w1_ref[...], preferred_element_type=jnp.float32)
    h = jnp.maximum(h + c1_ref[...], 0.0)
    # Layer 2: @ W2^T + b2, ReLU   (cast back to MXU dtype only for the matmul)
    h = jnp.dot(h.astype(cdt), w2_ref[...], preferred_element_type=jnp.float32)
    h = jnp.maximum(h + b2_ref[...], 0.0)
    # Layer 3: @ W3^T + b3 (no activation)
    o = jnp.dot(h.astype(cdt), w3_ref[...], preferred_element_type=jnp.float32)
    out_ref[...] = (o + b3_ref[...]).astype(out_ref.dtype)


def _choose_block_b(B):
    """Batch tile: multiple of 256 (covers v5e's 128 too), capped for VMEM,
    and guaranteeing >= 2 grid blocks on large B so both v7x TCs get work."""
    ALIGN = 256
    CAP = 2048                      # ~2 MB of f32 activations per step
    if B <= 2 * ALIGN:
        return B                    # single block; block_shape == full dim is legal
    half = -(-B // 2)               # ceil(B / 2)  -> at least 2 blocks
    tb = -(-half // ALIGN) * ALIGN  # round up to ALIGN
    return min(CAP, tb)


def user_mediator_mlp_forward(item_pop_embs, user_degree_embs, hu,
                              user_degree_prior, params, norm=False,
                              block_b=None, compute_dtype=jnp.float32):
    """Pallas forward of UserMediatorMLP.

    item_pop_embs:     (P, E)
    user_degree_embs:  (D, E)
    hu:                (B, E)
    user_degree_prior: (D, 1) per-row weights
    params: (w1t, b1, w2t, b2, w3t, b3) with w*t already transposed
            (w1t: (cate_num*E, H1), w2t: (H1, H2), w3t: (H2, E)).
    compute_dtype: dtype fed to the MXU (f32, or bf16 on v6e/v7x for ~2x MXU
            rate and half the weight/activation traffic).  Biases, ReLUs and
            accumulation stay f32.
    """
    w1t, b1, w2t, b2, w3t, b3 = params
    B, E = hu.shape
    H1 = w1t.shape[1]
    H2 = w2t.shape[1]
    Eout = w3t.shape[1]

    # ---- batch-independent constant path, folded into one f32 bias ----------
    wip = item_pop_embs.reshape(-1)                          # (P*E,)
    wud = user_degree_embs * user_degree_prior               # (D, E)
    if norm:
        wud = wud / jnp.linalg.norm(wud, axis=1, keepdims=True)
    wud = wud.reshape(-1)                                    # (D*E,)
    const = jnp.concatenate([wip, wud], axis=0)              # ((P+D)*E,)
    w1t_hu = w1t[:E]                                         # (E, H1)  multiplies hu
    w1t_const = w1t[E:]                                      # ((P+D)*E, H1)
    c1 = (const @ w1t_const + b1).reshape(1, H1).astype(jnp.float32)
    b2r = b2.reshape(1, H2).astype(jnp.float32)
    b3r = b3.reshape(1, Eout).astype(jnp.float32)

    # ---- MXU input dtype (bf16 halves traffic & doubles MXU rate on v6e/v7x)
    cdt = jnp.dtype(compute_dtype)
    hu_c = hu.astype(cdt)
    w1_c = w1t_hu.astype(cdt)
    w2_c = w2t.astype(cdt)
    w3_c = w3t.astype(cdt)

    # ---- batch tile / grid (no jnp.pad: Pallas masks the ragged last block) --
    tb = _choose_block_b(B) if block_b is None else block_b
    tb = min(tb, B)
    assert tb == B or tb % 8 == 0, "batch tile must be a multiple of 8 (or == B)"
    n_blocks = pl.cdiv(B, tb)

    flops = int(2 * B * (E * H1 + H1 * H2 + H2 * Eout))
    bytes_accessed = int(B * E * cdt.itemsize
                         + (E * H1 + H1 * H2 + H2 * Eout) * cdt.itemsize
                         + (H1 + H2 + Eout) * 4
                         + B * Eout * 4)

    out = pl.pallas_call(
        _mediator_mlp_kernel,
        out_shape=jax.ShapeDtypeStruct((B, Eout), jnp.float32),
        grid=(n_blocks,),
        in_specs=[
            pl.BlockSpec((tb, E), lambda b: (b, 0)),      # hu rows (pipelined)
            pl.BlockSpec((E, H1), lambda b: (0, 0)),      # W1 (hu half), resident
            pl.BlockSpec((1, H1), lambda b: (0, 0)),      # folded const bias c1 (f32)
            pl.BlockSpec((H1, H2), lambda b: (0, 0)),     # W2, resident
            pl.BlockSpec((1, H2), lambda b: (0, 0)),      # b2 (f32)
            pl.BlockSpec((H2, Eout), lambda b: (0, 0)),   # W3, resident
            pl.BlockSpec((1, Eout), lambda b: (0, 0)),    # b3 (f32)
        ],
        out_specs=pl.BlockSpec((tb, Eout), lambda b: (b, 0)),
        compiler_params=pltpu.CompilerParams(
            dimension_semantics=("parallel",)),
        cost_estimate=pl.CostEstimate(flops=flops, transcendentals=0,
                                      bytes_accessed=bytes_accessed),
    )(hu_c, w1_c, c1, w2_c, b2r, w3_c, b3r)

    return jnp.squeeze(out)   # mimic torch `.squeeze()`


def _ref_forward(item_pop_embs, user_degree_embs, hu, user_degree_prior,
                 params, norm=False):
    """Pure-JAX f32 reference matching the PyTorch forward exactly."""
    w1t, b1, w2t, b2, w3t, b3 = params
    B = hu.shape[0]
    wip = jnp.broadcast_to(item_pop_embs.reshape(1, -1), (B, item_pop_embs.size))
    wud = user_degree_embs * user_degree_prior
    if norm:
        wud = wud / jnp.linalg.norm(wud, axis=1, keepdims=True)
    wud = jnp.broadcast_to(wud.reshape(1, -1), (B, wud.size))
    x = jnp.concatenate([hu, wip, wud], axis=1)
    h = jnp.maximum(x @ w1t + b1, 0.0)
    h = jnp.maximum(h @ w2t + b2, 0.0)
    return jnp.squeeze(h @ w3t + b3)


def init_params(key, E, cate_num):
    """confounder_fuse: Linear(C, C//2) -> ReLU -> Linear(C//2, C//4) -> ReLU -> Linear(C//4, E)."""
    C = cate_num * E
    H1, H2 = C // 2, C // 4

    def linear(k, fan_in, fan_out):
        kw, kb = jax.random.split(k)
        std = (2.0 / (fan_in + fan_out)) ** 0.5
        wt = std * jax.random.normal(kw, (fan_in, fan_out), jnp.float32)  # = W^T
        b = 0.01 * jax.random.normal(kb, (fan_out,), jnp.float32)
        return wt, b

    k1, k2, k3 = jax.random.split(key, 3)
    w1t, b1 = linear(k1, C, H1)
    w2t, b2 = linear(k2, H1, H2)
    w3t, b3 = linear(k3, H2, E)
    return (w1t, b1, w2t, b2, w3t, b3)


if __name__ == "__main__":
    key = jax.random.PRNGKey(0)
    E = 32                      # edim
    P, D = 3, 4                 # len(item_pop_prior), len(user_degree_prior)
    cate_num = P + D + 1        # = 8  -> C=256, H1=128, H2=64

    keys = jax.random.split(key, 7)
    item_pop_embs = jax.random.normal(keys[0], (P, E), jnp.float32)
    user_degree_embs = jax.random.normal(keys[1], (D, E), jnp.float32)
    user_degree_prior = jax.nn.softmax(
        jax.random.normal(keys[3], (D, 1), jnp.float32), axis=0)
    params = init_params(keys[4], E, cate_num)

    # TODO(synk): the original PyTorch forward reads `self.norm`, which is never
    # set in __init__ (and `item_piror` is unused); exposed here as an explicit
    # `norm` flag, defaulting to False.

    # --- f32 path, small batch (single block), strict 1e-4 check -------------
    B1 = 16
    hu1 = jax.random.normal(keys[2], (B1, E), jnp.float32)
    out1 = user_mediator_mlp_forward(item_pop_embs, user_degree_embs, hu1,
                                     user_degree_prior, params, norm=False)
    out1 = jax.block_until_ready(out1)
    ref1 = _ref_forward(item_pop_embs, user_degree_embs, hu1,
                        user_degree_prior, params, norm=False)
    assert out1.shape == ref1.shape
    assert jnp.allclose(out1, ref1, atol=1e-4, rtol=1e-4)

    # --- bf16 MXU path, multi-block grid with ragged (masked) tail -----------
    B2 = 600                    # 3 blocks of 256 rows, last one ragged (no pad)
    hu2 = jax.random.normal(keys[5], (B2, E), jnp.float32)
    out2 = user_mediator_mlp_forward(item_pop_embs, user_degree_embs, hu2,
                                     user_degree_prior, params, norm=False,
                                     block_b=256, compute_dtype=jnp.bfloat16)
    out2 = jax.block_until_ready(out2)
    ref2 = _ref_forward(item_pop_embs, user_degree_embs, hu2,
                        user_degree_prior, params, norm=False)
    assert out2.shape == ref2.shape
    # bf16 MXU inputs with f32 accumulation -> loosened tolerance vs f32 ref
    assert jnp.allclose(out2, ref2, atol=5e-2, rtol=5e-2)

    print("KERNEL_OK")
</pallas_src>

<mosaic_0001>
module attributes {stable_mosaic.version = 11 : i64} {
  func.func @_mediator_mlp_kernel(%arg0: i32, %arg1: memref<16x32xf32, #tpu.memory_space<vmem>>, %arg2: memref<32x128xf32, #tpu.memory_space<vmem>>, %arg3: memref<1x128xf32, #tpu.memory_space<vmem>>, %arg4: memref<128x64xf32, #tpu.memory_space<vmem>>, %arg5: memref<1x64xf32, #tpu.memory_space<vmem>>, %arg6: memref<64x32xf32, #tpu.memory_space<vmem>>, %arg7: memref<1x32xf32, #tpu.memory_space<vmem>>, %arg8: memref<16x32xf32, #tpu.memory_space<vmem>>) attributes {dimension_semantics = [#tpu.dimension_semantics<parallel>], iteration_bounds = array<i64: 1>, scalar_prefetch = 0 : i64, scratch_operands = 0 : i64, tpu.core_type = #tpu.core_type<tc>, window_params = [{transform_indices = @transform_0, window_bounds = array<i64: 16, 32>}, {pipeline_mode = #tpu.pipeline_mode<synchronous>, transform_indices = @transform_1, window_bounds = array<i64: 32, 128>}, {pipeline_mode = #tpu.pipeline_mode<synchronous>, transform_indices = @transform_2, window_bounds = array<i64: 1, 128>}, {pipeline_mode = #tpu.pipeline_mode<synchronous>, transform_indices = @transform_3, window_bounds = array<i64: 128, 64>}, {pipeline_mode = #tpu.pipeline_mode<synchronous>, transform_indices = @transform_4, window_bounds = array<i64: 1, 64>}, {pipeline_mode = #tpu.pipeline_mode<synchronous>, transform_indices = @transform_5, window_bounds = array<i64: 64, 32>}, {pipeline_mode = #tpu.pipeline_mode<synchronous>, transform_indices = @transform_6, window_bounds = array<i64: 1, 32>}, {transform_indices = @transform_7, window_bounds = array<i64: 16, 32>}]} {
    %c0 = arith.constant 0 : index
    %c0_0 = arith.constant 0 : index
    %0 = vector.load %arg1[%c0, %c0_0] : memref<16x32xf32, #tpu.memory_space<vmem>>, vector<16x32xf32>
    %c0_1 = arith.constant 0 : index
    %c0_2 = arith.constant 0 : index
    %1 = vector.load %arg2[%c0_1, %c0_2] : memref<32x128xf32, #tpu.memory_space<vmem>>, vector<32x128xf32>
    %cst = arith.constant dense<0.000000e+00> : vector<16x128xf32>
    %2 = tpu.matmul %0, %1, %cst {dimension_numbers = #tpu.dot_dimension_numbers<[1], [0], [0], [1], [0, 0, 1, 1], [], []>} : vector<16x32xf32>, vector<32x128xf32>, vector<16x128xf32> -> vector<16x128xf32>
    %c0_3 = arith.constant 0 : index
    %c0_4 = arith.constant 0 : index
    %3 = vector.load %arg3[%c0_3, %c0_4] : memref<1x128xf32, #tpu.memory_space<vmem>>, vector<1x128xf32>
    %4 = vector.broadcast %3 : vector<1x128xf32> to vector<16x128xf32>
    %5 = arith.addf %2, %4 : vector<16x128xf32>
    %cst_5 = arith.constant 0.000000e+00 : f32
    %6 = vector.broadcast %cst_5 : f32 to vector<16x128xf32>
    %7 = arith.maximumf %5, %6 : vector<16x128xf32>
    %c0_6 = arith.constant 0 : index
    %c0_7 = arith.constant 0 : index
    %8 = vector.load %arg4[%c0_6, %c0_7] : memref<128x64xf32, #tpu.memory_space<vmem>>, vector<128x64xf32>
    %cst_8 = arith.constant dense<0.000000e+00> : vector<16x64xf32>
    %9 = tpu.matmul %7, %8, %cst_8 {dimension_numbers = #tpu.dot_dimension_numbers<[1], [0], [0], [1], [0, 0, 1, 1], [], []>} : vector<16x128xf32>, vector<128x64xf32>, vector<16x64xf32> -> vector<16x64xf32>
    %c0_9 = arith.constant 0 : index
    %c0_10 = arith.constant 0 : index
    %10 = vector.load %arg5[%c0_9, %c0_10] : memref<1x64xf32, #tpu.memory_space<vmem>>, vector<1x64xf32>
    %11 = vector.broadcast %10 : vector<1x64xf32> to vector<16x64xf32>
    %12 = arith.addf %9, %11 : vector<16x64xf32>
    %cst_11 = arith.constant 0.000000e+00 : f32
    %13 = vector.broadcast %cst_11 : f32 to vector<16x64xf32>
    %14 = arith.maximumf %12, %13 : vector<16x64xf32>
    %c0_12 = arith.constant 0 : index
    %c0_13 = arith.constant 0 : index
    %15 = vector.load %arg6[%c0_12, %c0_13] : memref<64x32xf32, #tpu.memory_space<vmem>>, vector<64x32xf32>
    %cst_14 = arith.constant dense<0.000000e+00> : vector<16x32xf32>
    %16 = tpu.matmul %14, %15, %cst_14 {dimension_numbers = #tpu.dot_dimension_numbers<[1], [0], [0], [1], [0, 0, 1, 1], [], []>} : vector<16x64xf32>, vector<64x32xf32>, vector<16x32xf32> -> vector<16x32xf32>
    %c0_15 = arith.constant 0 : index
    %c0_16 = arith.constant 0 : index
    %17 = vector.load %arg7[%c0_15, %c0_16] : memref<1x32xf32, #tpu.memory_space<vmem>>, vector<1x32xf32>
    %18 = vector.broadcast %17 : vector<1x32xf32> to vector<16x32xf32>
    %19 = arith.addf %16, %18 : vector<16x32xf32>
    %c0_17 = arith.constant 0 : index
    %c0_18 = arith.constant 0 : index
    %20 = vector.load %arg8[%c0_17, %c0_18] : memref<16x32xf32, #tpu.memory_space<vmem>>, vector<16x32xf32>
    tpu.vector_store %arg8[%c0_17, %c0_18], %19 {strides = array<i32>} : memref<16x32xf32, #tpu.memory_space<vmem>>, vector<16x32xf32>,
    return
  }
  func.func @transform_0(%arg0: i32) -> (i32, i32) {
    %c0_i32 = arith.constant 0 : i32
    %c0_i32_0 = arith.constant 0 : i32
    return %arg0, %c0_i32 : i32, i32
  }
  func.func @transform_1(%arg0: i32) -> (i32, i32) {
    %c0_i32 = arith.constant 0 : i32
    %c0_i32_0 = arith.constant 0 : i32
    %c0_i32_1 = arith.constant 0 : i32
    return %c0_i32, %c0_i32_0 : i32, i32
  }
  func.func @transform_2(%arg0: i32) -> (i32, i32) {
    %c0_i32 = arith.constant 0 : i32
    %c0_i32_0 = arith.constant 0 : i32
    %c0_i32_1 = arith.constant 0 : i32
    return %c0_i32, %c0_i32_0 : i32, i32
  }
  func.func @transform_3(%arg0: i32) -> (i32, i32) {
    %c0_i32 = arith.constant 0 : i32
    %c0_i32_0 = arith.constant 0 : i32
    %c0_i32_1 = arith.constant 0 : i32
    return %c0_i32, %c0_i32_0 : i32, i32
  }
  func.func @transform_4(%arg0: i32) -> (i32, i32) {
    %c0_i32 = arith.constant 0 : i32
    %c0_i32_0 = arith.constant 0 : i32
    %c0_i32_1 = arith.constant 0 : i32
    return %c0_i32, %c0_i32_0 : i32, i32
  }
  func.func @transform_5(%arg0: i32) -> (i32, i32) {
    %c0_i32 = arith.constant 0 : i32
    %c0_i32_0 = arith.constant 0 : i32
    %c0_i32_1 = arith.constant 0 : i32
    return %c0_i32, %c0_i32_0 : i32, i32
  }
  func.func @transform_6(%arg0: i32) -> (i32, i32) {
    %c0_i32 = arith.constant 0 : i32
    %c0_i32_0 = arith.constant 0 : i32
    %c0_i32_1 = arith.constant 0 : i32
    return %c0_i32, %c0_i32_0 : i32, i32
  }
  func.func @transform_7(%arg0: i32) -> (i32, i32) {
    %c0_i32 = arith.constant 0 : i32
    %c0_i32_0 = arith.constant 0 : i32
    return %arg0, %c0_i32 : i32, i32
  }
}

</mosaic_0001>

<llo_original>
// kernel: tpu_custom_call.1
$region0: #{tpu_custom_call.1}
  #allocation0 [shape = 'u32[]', space=smem, size = 0x4, offset = 0x4, fixed_abs, tag = 'smem constant byte address 0x4 - core index']
  #allocation1 [shape = 'u32[144,128]{1,0:T(1,128)}', space=vmem, size = 0x12000, scoped, tag = 'internal scratch']
  %s0 = inlined_call_operand.vmem [shape: f32[16,32], index: 0, kind: input, shape index: {}]
  %s1 = inlined_call_operand.vmem [shape: f32[32,128], index: 1, kind: input, shape index: {}]
  %s2 = inlined_call_operand.vmem [shape: f32[1,128], index: 2, kind: input, shape index: {}]
  %s3 = inlined_call_operand.vmem [shape: f32[128,64], index: 3, kind: input, shape index: {}]
  %s4 = inlined_call_operand.vmem [shape: f32[1,64], index: 4, kind: input, shape index: {}]
  %s5 = inlined_call_operand.vmem [shape: f32[64,32], index: 5, kind: input, shape index: {}]
  %s6 = inlined_call_operand.vmem [shape: f32[1,32], index: 6, kind: input, shape index: {}]
  %s7 = inlined_call_operand.hbm [shape: f32[16,32], index: 7, kind: output, shape index: {}]
  %s8 = sld [smem:[#allocation0]]
  $region38: #{tpu_custom_call.1} parent=0
    _
  %s10 = ssub.s32 1, %s8
  %s11 = scalar_select 0, %s10, %s8
  $region1: #{tpu_custom_call.1} parent=0
    #allocation2 [shape = 'u8[8192]{0}', space=vmem, size = 0x2000, scoped, tag = 'output window, operand 0, single buffered']
    #allocation3 [shape = 's32[1]{0}', space=sflag, size = 0x4, scoped, tag = 'scoped memory for tpu_custom_call.1']
    %12 = vsyncpa [#allocation3], 0
    // Predicated region
    $region2: #{tpu_custom_call.1} parent=1 // pred_check
      _
    $region3: #{tpu_custom_call.1} parent=1 // pred_check_branch
      %14 = sbr.rel (0) target = $region5
    $region4: #{tpu_custom_call.1} parent=1 // pred_region
      _
    $region5: #{tpu_custom_call.1} parent=1 // pred_fallthru
      _
    // Predicated region
    $region6: #{tpu_custom_call.1} parent=1 // pred_check
      _
    $region7: #{tpu_custom_call.1} parent=1 // pred_check_branch
      %16 = sbr.rel (0) target = $region9
    $region8: #{tpu_custom_call.1} parent=1 // pred_region
      _
    $region9: #{tpu_custom_call.1} parent=1 // pred_fallthru
      _
    // Predicated region
    $region10: #{tpu_custom_call.1} parent=1 // pred_check
      _
    $region11: #{tpu_custom_call.1} parent=1 // pred_check_branch
      %18 = sbr.rel (0) target = $region13
    $region12: #{tpu_custom_call.1} parent=1 // pred_region
      _
    $region13: #{tpu_custom_call.1} parent=1 // pred_fallthru
      _
    // Predicated region
    $region14: #{tpu_custom_call.1} parent=1 // pred_check
      _
    $region15: #{tpu_custom_call.1} parent=1 // pred_check_branch
      %20 = sbr.rel (0) target = $region17
    $region16: #{tpu_custom_call.1} parent=1 // pred_region
      _
    $region17: #{tpu_custom_call.1} parent=1 // pred_fallthru
      _
    // Predicated region
    $region18: #{tpu_custom_call.1} parent=1 // pred_check
      _
    $region19: #{tpu_custom_call.1} parent=1 // pred_check_branch
      %22 = sbr.rel (0) target = $region21
    $region20: #{tpu_custom_call.1} parent=1 // pred_region
      _
    $region21: #{tpu_custom_call.1} parent=1 // pred_fallthru
      _
    // Predicated region
    $region22: #{tpu_custom_call.1} parent=1 // pred_check
      _
    $region23: #{tpu_custom_call.1} parent=1 // pred_check_branch
      %24 = sbr.rel (0) target = $region25
    $region24: #{tpu_custom_call.1} parent=1 // pred_region
      _
    $region25: #{tpu_custom_call.1} parent=1 // pred_fallthru
      _
    // Predicated region
    $region26: #{tpu_custom_call.1} parent=1 // pred_check
      _
    $region27: #{tpu_custom_call.1} parent=1 // pred_check_branch
      %26 = sbr.rel (0) target = $region29
    $region28: #{tpu_custom_call.1} parent=1 // pred_region
      _
    $region29: #{tpu_custom_call.1} parent=1 // pred_fallthru
      _
    %v27 = vld [vmem:[%s0] sm:$0xff]
    %v28 = vld [vmem:[%s0 + $0x8] sm:$0xff]
    %v29 = vld [vmem:[%s1] sm:$0xff]
    %v30 = vld [vmem:[%s1 + $0x8] sm:$0xff]
    %v31 = vld [vmem:[%s1 + $0x10] sm:$0xff]
    %v32 = vld [vmem:[%s1 + $0x18] sm:$0xff]
    %v33 = vld [vmem:[%s2] sm:$0x1]
    %v35 = vlaneseq
    %v36 = vshrl.u32 %v35, 7
    %v37 = vsub.s32 0, %v36
    %v38 = vrot.slane %v33, %v37
    %vm40 = vcmask 261120
    %v42 = vsel %vm40, %v27, 0
    %v45 = vsel %vm40, %v28, 0
    %47 = vmatprep.subr.mxu0 0.0
    %48 = vmatpush1.msra.mxu0 0.0
    %49 = vmatprep.subr.mxu0 0.0
    %50 = vmatpush1.msra.mxu0 0.0
    %51 = vmatprep.subr.mxu0 0.0
    %52 = vmatpush1.msra.mxu0 0.0
    %53 = vmatprep.subr.mxu0 0.0
    %54 = vmatpush1.msra.mxu0 0.0
    %55 = vmatprep.subr.mxu0 0.0
    %56 = vmatpush1.msra.mxu0 0.0
    %57 = vmatprep.subr.mxu0 0.0
    %58 = vmatpush1.msra.mxu0 0.0
    %59 = vmatprep.subr.mxu0 0.0
    %60 = vmatpush1.msra.mxu0 0.0
    %61 = vmatprep.subr.mxu0 0.0
    %62 = vmatpush1.msra.mxu0 0.0
    %63 = vmatprep.subr.mxu0 0.0
    %64 = vmatpush1.msra.mxu0 0.0
    %65 = vmatprep.subr.mxu0 0.0
    %66 = vmatpush1.msra.mxu0 0.0
    %67 = vmatprep.subr.mxu0 0.0
    %68 = vmatpush1.msra.mxu0 0.0
    %69 = vmatprep.subr.mxu0 0.0
    %70 = vmatpush1.msra.mxu0 0.0
    %71 = vmatprep.subr.mxu0 0.0
    %72 = vmatpush1.msra.mxu0 %v32
    %73 = vmatprep.subr.mxu0 0.0
    %74 = vmatpush1.msra.mxu0 %v31
    %75 = vmatprep.subr.mxu0 0.0
    %76 = vmatpush1.msra.mxu0 %v30
    %77 = vmatprep.subr.mxu0 0.0
    %78 = vmatpush1.msra.mxu0 %v29
    %79 = vmatprep.subr.mxu0 0.0
    %80 = vmatpush2.msra.mxu0 0.0
    %81 = vmatprep.subr.mxu0 0.0
    %82 = vmatpush2.msra.mxu0 0.0
    %83 = vmatprep.subr.mxu0 0.0
    %84 = vmatpush2.msra.mxu0 0.0
    %85 = vmatprep.subr.mxu0 0.0
    %86 = vmatpush2.msra.mxu0 0.0
    %87 = vmatprep.subr.mxu0 0.0
    %88 = vmatpush2.msra.mxu0 0.0
    %89 = vmatprep.subr.mxu0 0.0
    %90 = vmatpush2.msra.mxu0 0.0
    %91 = vmatprep.subr.mxu0 0.0
    %92 = vmatpush2.msra.mxu0 0.0
    %93 = vmatprep.subr.mxu0 0.0
    %94 = vmatpush2.msra.mxu0 0.0
    %95 = vmatprep.subr.mxu0 0.0
    %96 = vmatpush2.msra.mxu0 0.0
    %97 = vmatprep.subr.mxu0 0.0
    %98 = vmatpush2.msra.mxu0 0.0
    %99 = vmatprep.subr.mxu0 0.0
    %100 = vmatpush2.msra.mxu0 0.0
    %101 = vmatprep.subr.mxu0 0.0
    %102 = vmatpush2.msra.mxu0 0.0
    %103 = vmatprep.subr.mxu0 0.0
    %104 = vmatpush2.msra.mxu0 0.0
    %105 = vmatprep.subr.mxu0 0.0
    %106 = vmatpush2.msra.mxu0 0.0
    %107 = vmatprep.subr.mxu0 0.0
    %108 = vmatpush2.msra.mxu0 0.0
    %109 = vmatprep.subr.mxu0 0.0
    %110 = vmatpush2.msra.mxu0 0.0
    %111 = vmatprep.mubr.f32.mxu0 0.0
    %112 = vmatmul.mubr.f32.gmra.mxu0 %v42
    %v113 = vpop.f32.mrf.mxu0
    %v114 = vadd.f32 %v38, %v113
    %v115 = vpop.f32.mrf.mxu0
    %116 = vmatprep.mubr.f32.mxu0 0.0
    %117 = vmatmul.mubr.f32.gmra.mxu0 %v45
    %v118 = vpop.f32.mrf.mxu0
    %v119 = vadd.f32 %v38, %v118
    %v120 = vpop.f32.mrf.mxu0
    %121 = vdwg.mxu0
    %v122 = vmax.f32 %v114, 0.0
    %v123 = vmax.f32 %v119, 0.0
    %v124 = vld [vmem:[%s3] sm:$0xff]
    %v125 = vld [vmem:[%s3 + $0x8] sm:$0xff]
    %v126 = vld [vmem:[%s3 + $0x10] sm:$0xff]
    %v127 = vld [vmem:[%s3 + $0x18] sm:$0xff]
    %v128 = vld [vmem:[%s3 + $0x20] sm:$0xff]
    %v129 = vld [vmem:[%s3 + $0x28] sm:$0xff]
    %v130 = vld [vmem:[%s3 + $0x30] sm:$0xff]
    %v131 = vld [vmem:[%s3 + $0x38] sm:$0xff]
    %v132 = vld [vmem:[%s3 + $0x40] sm:$0xff]
    %v133 = vld [vmem:[%s3 + $0x48] sm:$0xff]
    %v134 = vld [vmem:[%s3 + $0x50] sm:$0xff]
    %v135 = vld [vmem:[%s3 + $0x58] sm:$0xff]
    %v136 = vld [vmem:[%s3 + $0x60] sm:$0xff]
    %v137 = vld [vmem:[%s3 + $0x68] sm:$0xff]
    %v138 = vld [vmem:[%s3 + $0x70] sm:$0xff]
    %v139 = vld [vmem:[%s3 + $0x78] sm:$0xff]
    %v140 = vld [vmem:[%s4] sm:$0x1]
    %v142 = vlaneseq
    %v143 = vshrl.u32 %v142, 7
    %v144 = vsub.s32 0, %v143
    %v145 = vrot.slane %v140, %v144
    %147 = vmatprep.subr.mxu0 0.0
    %148 = vmatpush1.msra.mxu0 %v139
    %149 = vmatprep.subr.mxu0 0.0
    %150 = vmatpush1.msra.mxu0 %v138
    %151 = vmatprep.subr.mxu0 0.0
    %152 = vmatpush1.msra.mxu0 %v137
    %153 = vmatprep.subr.mxu0 0.0
    %154 = vmatpush1.msra.mxu0 %v136
    %155 = vmatprep.subr.mxu0 0.0
    %156 = vmatpush1.msra.mxu0 %v135
    %157 = vmatprep.subr.mxu0 0.0
    %158 = vmatpush1.msra.mxu0 %v134
    %159 = vmatprep.subr.mxu0 0.0
    %160 = vmatpush1.msra.mxu0 %v133
    %161 = vmatprep.subr.mxu0 0.0
    %162 = vmatpush1.msra.mxu0 %v132
    %163 = vmatprep.subr.mxu0 0.0
    %164 = vmatpush1.msra.mxu0 %v131
    %165 = vmatprep.subr.mxu0 0.0
    %166 = vmatpush1.msra.mxu0 %v130
    %167 = vmatprep.subr.mxu0 0.0
    %168 = vmatpush1.msra.mxu0 %v129
    %169 = vmatprep.subr.mxu0 0.0
    %170 = vmatpush1.msra.mxu0 %v128
    %171 = vmatprep.subr.mxu0 0.0
    %172 = vmatpush1.msra.mxu0 %v127
    %173 = vmatprep.subr.mxu0 0.0
    %174 = vmatpush1.msra.mxu0 %v126
    %175 = vmatprep.subr.mxu0 0.0
    %176 = vmatpush1.msra.mxu0 %v125
    %177 = vmatprep.subr.mxu0 0.0
    %178 = vmatpush1.msra.mxu0 %v124
    %179 = vmatprep.subr.mxu0 0.0
    %180 = vmatpush2.msra.mxu0 0.0
    %181 = vmatprep.subr.mxu0 0.0
    %182 = vmatpush2.msra.mxu0 0.0
    %183 = vmatprep.subr.mxu0 0.0
    %184 = vmatpush2.msra.mxu0 0.0
    %185 = vmatprep.subr.mxu0 0.0
    %186 = vmatpush2.msra.mxu0 0.0
    %187 = vmatprep.subr.mxu0 0.0
    %188 = vmatpush2.msra.mxu0 0.0
    %189 = vmatprep.subr.mxu0 0.0
    %190 = vmatpush2.msra.mxu0 0.0
    %191 = vmatprep.subr.mxu0 0.0
    %192 = vmatpush2.msra.mxu0 0.0
    %193 = vmatprep.subr.mxu0 0.0
    %194 = vmatpush2.msra.mxu0 0.0
    %195 = vmatprep.subr.mxu0 0.0
    %196 = vmatpush2.msra.mxu0 0.0
    %197 = vmatprep.subr.mxu0 0.0
    %198 = vmatpush2.msra.mxu0 0.0
    %199 = vmatprep.subr.mxu0 0.0
    %200 = vmatpush2.msra.mxu0 0.0
    %201 = vmatprep.subr.mxu0 0.0
    %202 = vmatpush2.msra.mxu0 0.0
    %203 = vmatprep.subr.mxu0 0.0
    %204 = vmatpush2.msra.mxu0 0.0
    %205 = vmatprep.subr.mxu0 0.0
    %206 = vmatpush2.msra.mxu0 0.0
    %207 = vmatprep.subr.mxu0 0.0
    %208 = vmatpush2.msra.mxu0 0.0
    %209 = vmatprep.subr.mxu0 0.0
    %210 = vmatpush2.msra.mxu0 0.0
    %211 = vmatprep.mubr.f32.mxu0 0.0
    %212 = vmatmul.mubr.f32.gmra.mxu0 %v122
    %v213 = vpop.f32.mrf.mxu0
    %v214 = vadd.f32 %v145, %v213
    %v215 = vpop.f32.mrf.mxu0
    %216 = vmatprep.mubr.f32.mxu0 0.0
    %217 = vmatmul.mubr.f32.gmra.mxu0 %v123
    %v218 = vpop.f32.mrf.mxu0
    %v219 = vadd.f32 %v145, %v218
    %v220 = vpop.f32.mrf.mxu0
    %221 = vdwg.mxu0
    %v222 = vmax.f32 %v214, 0.0
    %v223 = vmax.f32 %v219, 0.0
    %v224 = vld [vmem:[%s5] sm:$0xff]
    %v225 = vld [vmem:[%s5 + $0x8] sm:$0xff]
    %v226 = vld [vmem:[%s5 + $0x10] sm:$0xff]
    %v227 = vld [vmem:[%s5 + $0x18] sm:$0xff]
    %v228 = vld [vmem:[%s5 + $0x20] sm:$0xff]
    %v229 = vld [vmem:[%s5 + $0x28] sm:$0xff]
    %v230 = vld [vmem:[%s5 + $0x30] sm:$0xff]
    %v231 = vld [vmem:[%s5 + $0x38] sm:$0xff]
    %v232 = vld [vmem:[%s6] sm:$0x1]
    %v234 = vlaneseq
    %v235 = vshrl.u32 %v234, 7
    %v236 = vsub.s32 0, %v235
    %v237 = vrot.slane %v232, %v236
    %vm239 = vcmask 523264
    %v241 = vsel %vm239, %v222, 0
    %v244 = vsel %vm239, %v223, 0
    %246 = vmatprep.subr.mxu0 0.0
    %247 = vmatpush1.msra.mxu0 0.0
    %248 = vmatprep.subr.mxu0 0.0
    %249 = vmatpush1.msra.mxu0 0.0
    %250 = vmatprep.subr.mxu0 0.0
    %251 = vmatpush1.msra.mxu0 0.0
    %252 = vmatprep.subr.mxu0 0.0
    %253 = vmatpush1.msra.mxu0 0.0
    %254 = vmatprep.subr.mxu0 0.0
    %255 = vmatpush1.msra.mxu0 0.0
    %256 = vmatprep.subr.mxu0 0.0
    %257 = vmatpush1.msra.mxu0 0.0
    %258 = vmatprep.subr.mxu0 0.0
    %259 = vmatpush1.msra.mxu0 0.0
    %260 = vmatprep.subr.mxu0 0.0
    %261 = vmatpush1.msra.mxu0 0.0
    %262 = vmatprep.subr.mxu0 0.0
    %263 = vmatpush1.msra.mxu0 %v231
    %264 = vmatprep.subr.mxu0 0.0
    %265 = vmatpush1.msra.mxu0 %v230
    %266 = vmatprep.subr.mxu0 0.0
    %267 = vmatpush1.msra.mxu0 %v229
    %268 = vmatprep.subr.mxu0 0.0
    %269 = vmatpush1.msra.mxu0 %v228
    %270 = vmatprep.subr.mxu0 0.0
    %271 = vmatpush1.msra.mxu0 %v227
    %272 = vmatprep.subr.mxu0 0.0
    %273 = vmatpush1.msra.mxu0 %v226
    %274 = vmatprep.subr.mxu0 0.0
    %275 = vmatpush1.msra.mxu0 %v225
    %276 = vmatprep.subr.mxu0 0.0
    %277 = vmatpush1.msra.mxu0 %v224
    %278 = vmatprep.subr.mxu0 0.0
    %279 = vmatpush2.msra.mxu0 0.0
    %280 = vmatprep.subr.mxu0 0.0
    %281 = vmatpush2.msra.mxu0 0.0
    %282 = vmatprep.subr.mxu0 0.0
    %283 = vmatpush2.msra.mxu0 0.0
    %284 = vmatprep.subr.mxu0 0.0
    %285 = vmatpush2.msra.mxu0 0.0
    %286 = vmatprep.subr.mxu0 0.0
    %287 = vmatpush2.msra.mxu0 0.0
    %288 = vmatprep.subr.mxu0 0.0
    %289 = vmatpush2.msra.mxu0 0.0
    %290 = vmatprep.subr.mxu0 0.0
    %291 = vmatpush2.msra.mxu0 0.0
    %292 = vmatprep.subr.mxu0 0.0
    %293 = vmatpush2.msra.mxu0 0.0
    %294 = vmatprep.subr.mxu0 0.0
    %295 = vmatpush2.msra.mxu0 0.0
    %296 = vmatprep.subr.mxu0 0.0
    %297 = vmatpush2.msra.mxu0 0.0
    %298 = vmatprep.subr.mxu0 0.0
    %299 = vmatpush2.msra.mxu0 0.0
    %300 = vmatprep.subr.mxu0 0.0
    %301 = vmatpush2.msra.mxu0 0.0
    %302 = vmatprep.subr.mxu0 0.0
    %303 = vmatpush2.msra.mxu0 0.0
    %304 = vmatprep.subr.mxu0 0.0
    %305 = vmatpush2.msra.mxu0 0.0
    %306 = vmatprep.subr.mxu0 0.0
    %307 = vmatpush2.msra.mxu0 0.0
    %308 = vmatprep.subr.mxu0 0.0
    %309 = vmatpush2.msra.mxu0 0.0
    %310 = vmatprep.mubr.f32.mxu0 0.0
    %311 = vmatmul.mubr.f32.gmra.mxu0 %v241
    %v312 = vpop.f32.mrf.mxu0
    %v313 = vadd.f32 %v237, %v312
    %v314 = vpop.f32.mrf.mxu0
    %315 = vmatprep.mubr.f32.mxu0 0.0
    %316 = vmatmul.mubr.f32.gmra.mxu0 %v244
    %v317 = vpop.f32.mrf.mxu0
    %v318 = vadd.f32 %v237, %v317
    %v319 = vpop.f32.mrf.mxu0
    %320 = vdwg.mxu0
    %321 = vst.msk [vmem:[#allocation2] sm:$0xff] %vm40, %v313
    %322 = vst.msk [vmem:[#allocation2 + $0x8] sm:$0xff] %vm40, %v318
    // Predicated region
    $region30: #{tpu_custom_call.1} parent=1 // pred_check
      _
    $region31: #{tpu_custom_call.1} parent=1 // pred_check_branch
      %324 = sbr.rel (0) target = $region33
    $region32: #{tpu_custom_call.1} parent=1 // pred_region
      %s326 = ssub.s32 256, 256
      %327 = vsyncadd [#allocation3], %s326
      %s328 = sshll.u32 [#allocation2], 4
      %s329 = int_to_ptr.vmem [resolvable:$true] %s328
      %334 = dma.vmem_to_hbm [thread:$0]  %s329, 256, %s7, [#allocation3], 128, 128, 8
    $region33: #{tpu_custom_call.1} parent=1 // pred_fallthru
      _
    // Predicated region
    $region34: #{tpu_custom_call.1} parent=1 // pred_check
      _
    $region35: #{tpu_custom_call.1} parent=1 // pred_check_branch
      %336 = sbr.rel (0) target = $region37
    $region36: #{tpu_custom_call.1} parent=1 // pred_region
      %337 = dma.done [#allocation3], 256
    $region37: #{tpu_custom_call.1} parent=1 // pred_fallthru
      _
    %338 = vsyncpa [#allocation3], 1

</llo_original>
